<compile_context>
chip_gen: v7x
topology: tpu7x:2x2x1
jax: 0.10.0
libtpu: 0.0.40
codegen_flags: <defaults>
</compile_context>

<pallas_src>
import math
from functools import partial

import numpy as np

import jax
import jax.numpy as jnp
from jax import lax
from jax.experimental import pallas as pl
from jax.experimental.pallas import tpu as pltpu


_LANES = 128
_LOSS_ROWS = 8


def _cdiv(a, b):
    return -(-a // b)


def _round_up(a, b):
    return _cdiv(a, b) * b


def _choose_tiling(n_cells, nB):
    """Sublane-dense tiling of the flattened nA*nH*nW per-batch plane.

    Returns (tile_p, nT, Ppad): spatial tile is (tile_p, 128) with tile_p a
    multiple of 8; Ppad = tile_p * nT sublane rows (zero-padded).
    """
    P0 = _cdiv(n_cells, _LANES)           # sublane rows actually needed
    MAX_TILE_P = 256                      # keep per-step block small (v7x VMEM)
    nT_min = _cdiv(P0, MAX_TILE_P)
    nT_tgt = max(1, 8 // max(1, nB))      # aim for ~8 pipelined grid steps
    nT = max(nT_min, min(nT_tgt, _cdiv(P0, 8)))
    tile_p = _round_up(_cdiv(P0, nT), 8)
    Ppad = tile_p * nT
    return tile_p, nT, Ppad


# --------------------------------------------------------------------------
# Pallas kernel 1: box decode (pred boxes for build_targets)
# --------------------------------------------------------------------------
def _decode_kernel(out_ref, gx_ref, gy_ref, aw_ref, ah_ref, pred_ref):
    # out_ref : (4, tile_p, 128)  raw x, y, w, h dense planes (one batch tile)
    # gx/gy   : (tile_p, 128)     pre-broadcast grid offsets
    # aw/ah   : (tile_p, 128)     pre-broadcast anchor sizes
    # pred_ref: (4, tile_p, 128)  decoded boxes [bx, by, bw, bh]
    pred_ref[0] = jax.nn.sigmoid(out_ref[0]) + gx_ref[...]
    pred_ref[1] = jax.nn.sigmoid(out_ref[1]) + gy_ref[...]
    pred_ref[2] = jnp.exp(out_ref[2]) * aw_ref[...]
    pred_ref[3] = jnp.exp(out_ref[3]) * ah_ref[...]


def pallas_decode(out_cf, gx, gy, aw, ah, tile_p):
    nCh, nB, Ppad, lanes = out_cf.shape
    nT = Ppad // tile_p
    return pl.pallas_call(
        _decode_kernel,
        grid=(nB, nT),
        in_specs=[
            # Only the first 4 channels of the (5+nC)-channel slab are DMA'd.
            pl.BlockSpec((4, None, tile_p, lanes), lambda b, t: (0, b, t, 0)),
            pl.BlockSpec((tile_p, lanes), lambda b, t: (t, 0)),
            pl.BlockSpec((tile_p, lanes), lambda b, t: (t, 0)),
            pl.BlockSpec((tile_p, lanes), lambda b, t: (t, 0)),
            pl.BlockSpec((tile_p, lanes), lambda b, t: (t, 0)),
        ],
        out_specs=pl.BlockSpec((4, None, tile_p, lanes), lambda b, t: (0, b, t, 0)),
        out_shape=jax.ShapeDtypeStruct((4, nB, Ppad, lanes), jnp.float32),
        compiler_params=pltpu.CompilerParams(
            dimension_semantics=("parallel", "parallel")),
    )(out_cf, gx, gy, aw, ah)


# --------------------------------------------------------------------------
# Pallas kernel 2: fused masked SmoothL1 / MSE / focal-cls reductions
# --------------------------------------------------------------------------
def _loss_kernel(out_ref, tgt_ref, loss_ref, *, n_valid):
    # out_ref : (5+nC, tile_p, 128) raw channel-first dense planes (one tile)
    # tgt_ref : (9, tile_p, 128)    [tx, ty, tw, th, tconf, coord_mask,
    #                                sqrt(conf_mask), cls_mask, tcls]
    # loss_ref: (8, 128)            packed per-batch sums, accumulated over tiles
    nC = out_ref.shape[0] - 5
    tile_p, lanes = out_ref.shape[1], out_ref.shape[2]
    t = pl.program_id(1)

    cm = tgt_ref[5]              # coord mask (0/1)
    cf = tgt_ref[6]              # sqrt(conf mask)

    x = jax.nn.sigmoid(out_ref[0])
    y = jax.nn.sigmoid(out_ref[1])
    w = out_ref[2]
    h = out_ref[3]
    conf = jax.nn.sigmoid(out_ref[4])

    def smooth_l1_sum(p, tgt):
        # reference: SmoothL1Loss(p * coord_mask, tgt * coord_mask), sum-reduced
        d = jnp.abs(p * cm - tgt * cm)
        e = jnp.where(d < 1.0, 0.5 * d * d, d - 0.5)
        return jnp.sum(e, keepdims=True)            # (1, 1)

    l_x = smooth_l1_sum(x, tgt_ref[0])
    l_y = smooth_l1_sum(y, tgt_ref[1])
    l_w = smooth_l1_sum(w, tgt_ref[2])
    l_h = smooth_l1_sum(h, tgt_ref[3])

    dconf = conf * cf - tgt_ref[4] * cf             # MSE(conf*cf, tconf*cf)
    l_conf = jnp.sum(dconf * dconf, keepdims=True)

    # Validity mask for the zero-padded tail, derived from the static cell count
    # (cheaper than DMAing an extra plane).
    sub = lax.broadcasted_iota(jnp.int32, (tile_p, lanes), 0)
    lane = lax.broadcasted_iota(jnp.int32, (tile_p, lanes), 1)
    cell = (t * tile_p + sub) * lanes + lane
    valid = (cell < n_valid).astype(jnp.float32)
    n_prop = jnp.sum(jnp.where(conf > 0.25, valid, 0.0), keepdims=True)

    # --- masked softmax focal classification loss (sum over selected GT cells) ---
    # TODO(synk): FocalLoss class body is not in the reference source; this is a
    # standard sum-reduced softmax focal loss with alpha=1, gamma=0.5.
    cls_m = tgt_ref[7]
    tcls_i = tgt_ref[8].astype(jnp.int32)

    # fori_loop over classes (dynamic channel index) keeps the live set bounded
    # instead of unrolling nC iterations of temporaries in registers.
    def max_body(c, m):
        return jnp.maximum(m, out_ref[5 + c])

    m = lax.fori_loop(1, nC, max_body, out_ref[5], unroll=4)

    def se_body(c, carry):
        s, lt = carry
        lc = out_ref[5 + c]
        s = s + jnp.exp(lc - m)
        lt = lt + jnp.where(tcls_i == c, lc, 0.0)
        return s, lt

    s, logit_t = lax.fori_loop(
        0, nC, se_body, (jnp.zeros_like(m), jnp.zeros_like(m)), unroll=4)

    logpt = (logit_t - m) - jnp.log(s)
    pt = jnp.exp(logpt)
    l_cls = jnp.sum(cls_m * jnp.sqrt(jnp.maximum(1.0 - pt, 0.0)) * (-logpt),
                    keepdims=True)

    # --- packed, lane-dense output: one (8,128) value, one unmasked store/step ---
    rows = lax.broadcasted_iota(jnp.int32, (_LOSS_ROWS, _LANES), 0)
    tile_vals = (jnp.where(rows == 0, l_x, 0.0)
                 + jnp.where(rows == 1, l_y, 0.0)
                 + jnp.where(rows == 2, l_w, 0.0)
                 + jnp.where(rows == 3, l_h, 0.0)
                 + jnp.where(rows == 4, l_conf, 0.0)
                 + jnp.where(rows == 5, l_cls, 0.0)
                 + jnp.where(rows == 6, n_prop, 0.0))

    @pl.when(t == 0)
    def _():
        loss_ref[...] = tile_vals

    @pl.when(t > 0)
    def _():
        loss_ref[...] = loss_ref[...] + tile_vals


def pallas_losses(out_cf, targets, tile_p, n_valid):
    nCh, nB, Ppad, lanes = out_cf.shape
    nT = Ppad // tile_p
    nTgt = targets.shape[0]
    return pl.pallas_call(
        partial(_loss_kernel, n_valid=n_valid),
        grid=(nB, nT),
        in_specs=[
            pl.BlockSpec((nCh, None, tile_p, lanes), lambda b, t: (0, b, t, 0)),
            pl.BlockSpec((nTgt, None, tile_p, lanes), lambda b, t: (0, b, t, 0)),
        ],
        out_specs=pl.BlockSpec((None, _LOSS_ROWS, _LANES), lambda b, t: (b, 0, 0)),
        out_shape=jax.ShapeDtypeStruct((nB, _LOSS_ROWS, _LANES), jnp.float32),
        compiler_params=pltpu.CompilerParams(
            dimension_semantics=("parallel", "arbitrary")),
    )(out_cf, targets)


# --------------------------------------------------------------------------
# Host-side helpers (mirror the PyTorch reference exactly)
# --------------------------------------------------------------------------
def bbox_iou(box1, box2, x1y1x2y2=True):
    if x1y1x2y2:
        mx = min(box1[0], box2[0]); Mx = max(box1[2], box2[2])
        my = min(box1[1], box2[1]); My = max(box1[3], box2[3])
        w1 = box1[2] - box1[0]; h1 = box1[3] - box1[1]
        w2 = box2[2] - box2[0]; h2 = box2[3] - box2[1]
    else:
        mx = min(box1[0] - box1[2] / 2.0, box2[0] - box2[2] / 2.0)
        Mx = max(box1[0] + box1[2] / 2.0, box2[0] + box2[2] / 2.0)
        my = min(box1[1] - box1[3] / 2.0, box2[1] - box2[3] / 2.0)
        My = max(box1[1] + box1[3] / 2.0, box2[1] + box2[3] / 2.0)
        w1 = box1[2]; h1 = box1[3]; w2 = box2[2]; h2 = box2[3]
    uw = Mx - mx
    uh = My - my
    cw = w1 + w2 - uw
    ch = h1 + h2 - uh
    if cw <= 0 or ch <= 0:
        return 0.0
    area1 = w1 * h1
    area2 = w2 * h2
    carea = cw * ch
    return float(carea / (area1 + area2 - carea))


def bbox_ious_np(boxes1, boxes2):
    # boxes: (4, N) / broadcastable, center (x, y, w, h) format
    b1x1 = boxes1[0] - boxes1[2] / 2.0; b1x2 = boxes1[0] + boxes1[2] / 2.0
    b1y1 = boxes1[1] - boxes1[3] / 2.0; b1y2 = boxes1[1] + boxes1[3] / 2.0
    b2x1 = boxes2[0] - boxes2[2] / 2.0; b2x2 = boxes2[0] + boxes2[2] / 2.0
    b2y1 = boxes2[1] - boxes2[3] / 2.0; b2y2 = boxes2[1] + boxes2[3] / 2.0
    mx = np.minimum(b1x1, b2x1); Mx = np.maximum(b1x2, b2x2)
    my = np.minimum(b1y1, b2y1); My = np.maximum(b1y2, b2y2)
    w1 = b1x2 - b1x1; h1 = b1y2 - b1y1
    w2 = b2x2 - b2x1; h2 = b2y2 - b2y1
    cw = w1 + w2 - (Mx - mx)
    ch = h1 + h2 - (My - my)
    bad = (cw <= 0) | (ch <= 0)
    carea = np.where(bad, 0.0, cw * ch)
    uarea = w1 * h1 + w2 * h2 - carea
    return (carea / uarea).astype(np.float32)


def build_targets_np(pred_cf, target, anchors, num_anchors, num_classes,
                     nH, nW, noobject_scale, object_scale, sil_thresh, seen):
    # pred_cf: (4, nB, nA, nH*nW) decoded boxes straight from the decode kernel.
    nB = target.shape[0]
    nA = int(num_anchors)
    anchor_step = len(anchors) // num_anchors
    conf_mask = np.ones((nB, nA, nH, nW), dtype=np.float32) * noobject_scale
    coord_mask = np.zeros((nB, nA, nH, nW), dtype=np.float32)
    cls_mask = np.zeros((nB, nA, nH, nW), dtype=np.float32)
    tx = np.zeros((nB, nA, nH, nW), dtype=np.float32)
    ty = np.zeros_like(tx); tw = np.zeros_like(tx); th = np.zeros_like(tx)
    tconf = np.zeros_like(tx); tcls = np.zeros_like(tx)
    nAnchors = nA * nH * nW
    nPixels = nH * nW

    for b in range(nB):
        cur_pred_boxes = pred_cf[:, b].reshape(4, nAnchors)       # (4, nAnchors)
        cur_ious = np.zeros(nAnchors, dtype=np.float32)
        for t in range(50):
            if target[b, t * 5 + 1] == 0:
                break
            gx = target[b, t * 5 + 1] * nW
            gy = target[b, t * 5 + 2] * nH
            gw = target[b, t * 5 + 3] * nW
            gh = target[b, t * 5 + 4] * nH
            cur_gt = np.array([gx, gy, gw, gh], dtype=np.float32).reshape(4, 1)
            cur_ious = np.maximum(cur_ious, bbox_ious_np(cur_pred_boxes, cur_gt))
        cm = conf_mask[b].reshape(-1).copy()
        cm[cur_ious > sil_thresh] = 0
        conf_mask[b] = cm.reshape(nA, nH, nW)

    if seen < 12800:
        if anchor_step == 4:
            # NOTE: the reference index-selects anchor column 2 for BOTH tx and
            # ty; reproduced verbatim here.
            av = np.array(anchors, dtype=np.float32).reshape(nA, anchor_step)
            tx = np.broadcast_to(av[:, 2].reshape(1, nA, 1, 1),
                                 (nB, nA, nH, nW)).astype(np.float32).copy()
            ty = tx.copy()
        else:
            tx.fill(0.5)
            ty.fill(0.5)
        tw.fill(0.0)
        th.fill(0.0)
        coord_mask.fill(1.0)

    nGT = 0
    nCorrect = 0
    for b in range(nB):
        for t in range(50):
            if target[b, t * 5 + 1] == 0:
                break
            nGT += 1
            best_iou = 0.0
            best_n = -1
            min_dist = 10000.0
            gx = float(target[b, t * 5 + 1] * nW)
            gy = float(target[b, t * 5 + 2] * nH)
            gi = int(gx); gj = int(gy)
            gw = float(target[b, t * 5 + 3] * nW)
            gh = float(target[b, t * 5 + 4] * nH)
            gt_box = [0, 0, gw, gh]
            for n in range(nA):
                aw = anchors[int(anchor_step * n)]
                ah = anchors[int(anchor_step * n) + 1]
                iou = bbox_iou([0, 0, aw, ah], gt_box, x1y1x2y2=False)
                if anchor_step == 4:
                    ax = anchors[anchor_step * n + 2]
                    ay = anchors[anchor_step * n + 3]
                    dist = (gi + ax - gx) ** 2 + (gj + ay - gy) ** 2
                if iou > best_iou:
                    best_iou = iou
                    best_n = n
                elif anchor_step == 4 and iou == best_iou and dist < min_dist:
                    best_iou = iou
                    best_n = n
                    min_dist = dist
            gt_box = [gx, gy, gw, gh]
            pred_box = pred_cf[:, b, best_n, gj * nW + gi]
            coord_mask[b, best_n, gj, gi] = 1
            cls_mask[b, best_n, gj, gi] = 1
            conf_mask[b, best_n, gj, gi] = object_scale
            tx[b, best_n, gj, gi] = target[b, t * 5 + 1] * nW - gi
            ty[b, best_n, gj, gi] = target[b, t * 5 + 2] * nH - gj
            tw[b, best_n, gj, gi] = math.log(gw / anchors[int(anchor_step * best_n)])
            th[b, best_n, gj, gi] = math.log(gh / anchors[int(anchor_step * best_n) + 1])
            iou = bbox_iou(gt_box, pred_box, x1y1x2y2=False)
            tconf[b, best_n, gj, gi] = iou
            tcls[b, best_n, gj, gi] = target[b, t * 5]
            if iou > 0.5:
                nCorrect += 1
    return (nGT, nCorrect, coord_mask, conf_mask, cls_mask,
            tx, ty, tw, th, tconf, tcls)


# --------------------------------------------------------------------------
# RegionLoss (forward only), Pallas-backed
# --------------------------------------------------------------------------
class RegionLossPallas:
    def __init__(self, num_classes=0, anchors=(), num_anchors=1):
        self.num_classes = num_classes
        self.anchors = list(anchors)
        self.num_anchors = int(num_anchors)
        self.anchor_step = int(len(self.anchors) // self.num_anchors)
        self.coord_scale = 1
        self.noobject_scale = 1
        self.object_scale = 5
        self.class_scale = 1
        self.thresh = 0.6
        self.seen = 0
        self._const_cache = {}   # device-resident constants keyed by map size

    def _get_consts(self, nA, nH, nW, nB):
        key = (nA, nH, nW, nB)
        cached = self._const_cache.get(key)
        if cached is not None:
            return cached
        nHW = nH * nW
        n_cells = nA * nHW
        tile_p, nT, Ppad = _choose_tiling(n_cells, nB)
        pad = Ppad * _LANES - n_cells

        aw = np.array([self.anchors[a * self.anchor_step] for a in range(nA)],
                      dtype=np.float32)
        ah = np.array([self.anchors[a * self.anchor_step + 1] for a in range(nA)],
                      dtype=np.float32)
        gx = np.tile(np.tile(np.arange(nW, dtype=np.float32), nH), nA)
        gy = np.tile(np.repeat(np.arange(nH, dtype=np.float32), nW), nA)
        awp = np.repeat(aw, nHW)
        ahp = np.repeat(ah, nHW)

        def to_plane(v):
            v = np.pad(v, (0, pad)).astype(np.float32)
            return jnp.asarray(v.reshape(Ppad, _LANES))

        consts = dict(tile_p=tile_p, nT=nT, Ppad=Ppad, pad=pad, n_cells=n_cells,
                      gx=to_plane(gx), gy=to_plane(gy),
                      aw=to_plane(awp), ah=to_plane(ahp))
        self._const_cache[key] = consts
        return consts

    def forward(self, output, target):
        output = jnp.asarray(output)
        nB = output.shape[0]
        nA = self.num_anchors
        nC = self.num_classes
        nH = output.shape[2]
        nW = output.shape[3]
        nHW = nH * nW

        c = self._get_consts(nA, nH, nW, nB)
        tile_p = c["tile_p"]
        Ppad = c["Ppad"]
        pad = c["pad"]
        n_cells = c["n_cells"]

        # Channel-first, sublane-dense padded layout (5+nC, nB, Ppad, 128).
        # TODO(synk): this XLA transpose is one extra HBM pass over the
        # activation; folding the relayout into kernel 1 needs nHW % 128 == 0.
        x = jnp.transpose(
            output.reshape(nB, nA, 5 + nC, nHW).astype(jnp.float32), (2, 0, 1, 3))
        x = x.reshape(5 + nC, nB, n_cells)
        if pad:
            x = jnp.pad(x, ((0, 0), (0, 0), (0, pad)))
        out_cf = x.reshape(5 + nC, nB, Ppad, _LANES)

        # ---- Pallas kernel 1: pred boxes (only tensor that must visit host) ----
        pred_dense = pallas_decode(out_cf, c["gx"], c["gy"], c["aw"], c["ah"], tile_p)
        pred_np = np.asarray(pred_dense).reshape(4, nB, Ppad * _LANES)[:, :, :n_cells]
        pred_np = pred_np.reshape(4, nB, nA, nHW)

        # ---- build_targets: data-dependent host logic (as in PyTorch) ----
        target_np = np.asarray(target, dtype=np.float32)
        (nGT, nCorrect, coord_mask, conf_mask, cls_mask,
         tx, ty, tw, th, tconf, tcls) = build_targets_np(
            pred_np, target_np, self.anchors, nA, nC, nH, nW,
            self.noobject_scale, self.object_scale, self.thresh, self.seen)

        # Single packed host->device transfer of all targets / masks, in the same
        # dense padded layout as out_cf (zero padding contributes nothing: all
        # masks are zero there).
        planes = np.stack(
            [tx, ty, tw, th, tconf, coord_mask, np.sqrt(conf_mask),
             cls_mask, tcls], axis=0).reshape(9, nB, n_cells).astype(np.float32)
        if pad:
            planes = np.pad(planes, ((0, 0), (0, 0), (0, pad)))
        targets = jnp.asarray(planes.reshape(9, nB, Ppad, _LANES))

        # ---- Pallas kernel 2: all loss reductions fused, packed output ----
        packed = pallas_losses(out_cf, targets, tile_p, n_cells)
        sums = jnp.sum(packed[:, :, 0], axis=0)          # (8,) summed over batch

        loss_x = self.coord_scale * sums[0] / 2.0
        loss_y = self.coord_scale * sums[1] / 2.0
        loss_w = self.coord_scale * sums[2] / 2.0
        loss_h = self.coord_scale * sums[3] / 2.0
        loss_conf = sums[4] / 2.0
        loss_cls = self.class_scale * sums[5]
        n_proposals = sums[6]                             # stat (not printed)
        _ = (nGT, nCorrect, n_proposals)

        return loss_x + loss_y + loss_w + loss_h + loss_conf + loss_cls


# --------------------------------------------------------------------------
if __name__ == "__main__":
    num_classes = 20
    anchors = [1.3221, 1.73145, 3.19275, 4.00944, 5.05587,
               8.09892, 9.47112, 4.84053, 11.2364, 10.0071]
    num_anchors = 5
    nB, nH, nW = 2, 16, 16

    module = RegionLossPallas(num_classes=num_classes, anchors=anchors,
                              num_anchors=num_anchors)

    key = jax.random.PRNGKey(0)
    output = 0.5 * jax.random.normal(
        key, (nB, num_anchors * (5 + num_classes), nH, nW), dtype=jnp.float32)

    # target: (nB, 50*5) rows of (class, x, y, w, h) normalized; x==0 terminates
    target_np = np.zeros((nB, 50 * 5), dtype=np.float32)
    target_np[0, 0:5] = [3.0, 0.55, 0.40, 0.30, 0.25]
    target_np[0, 5:10] = [7.0, 0.20, 0.70, 0.15, 0.20]
    target_np[1, 0:5] = [12.0, 0.60, 0.60, 0.40, 0.50]
    target = jnp.asarray(target_np)

    loss = module.forward(output, target)
    jax.block_until_ready(loss)
    assert np.isfinite(float(loss))
    print("KERNEL_OK")
</pallas_src>

<mosaic_0001>
module attributes {stable_mosaic.version = 11 : i64} {
  func.func @_decode_kernel(%arg0: i32, %arg1: i32, %arg2: memref<4x1x8x128xf32, #tpu.memory_space<vmem>>, %arg3: memref<8x128xf32, #tpu.memory_space<vmem>>, %arg4: memref<8x128xf32, #tpu.memory_space<vmem>>, %arg5: memref<8x128xf32, #tpu.memory_space<vmem>>, %arg6: memref<8x128xf32, #tpu.memory_space<vmem>>, %arg7: memref<4x1x8x128xf32, #tpu.memory_space<vmem>>) attributes {dimension_semantics = [#tpu.dimension_semantics<parallel>, #tpu.dimension_semantics<parallel>], iteration_bounds = array<i64: 2, 2>, scalar_prefetch = 0 : i64, scratch_operands = 0 : i64, tpu.core_type = #tpu.core_type<tc>, window_params = [{transform_indices = @transform_0, window_bounds = array<i64: 4, 1, 8, 128>}, {transform_indices = @transform_1, window_bounds = array<i64: 8, 128>}, {transform_indices = @transform_2, window_bounds = array<i64: 8, 128>}, {transform_indices = @transform_3, window_bounds = array<i64: 8, 128>}, {transform_indices = @transform_4, window_bounds = array<i64: 8, 128>}, {transform_indices = @transform_5, window_bounds = array<i64: 4, 1, 8, 128>}]} {
    %c0 = arith.constant 0 : index
    %c0_0 = arith.constant 0 : index
    %c0_1 = arith.constant 0 : index
    %c0_2 = arith.constant 0 : index
    %0 = vector.load %arg2[%c0, %c0_0, %c0_1, %c0_2] : memref<4x1x8x128xf32, #tpu.memory_space<vmem>>, vector<1x1x8x128xf32>
    %1 = vector.shape_cast %0 : vector<1x1x8x128xf32> to vector<8x128xf32>
    %2 = arith.negf %1 : vector<8x128xf32>
    %3 = math.exp %2 : vector<8x128xf32>
    %cst = arith.constant 1.000000e+00 : f32
    %4 = vector.broadcast %cst : f32 to vector<8x128xf32>
    %5 = arith.addf %4, %3 : vector<8x128xf32>
    %6 = arith.divf %4, %5 : vector<8x128xf32>
    %c0_3 = arith.constant 0 : index
    %c0_4 = arith.constant 0 : index
    %7 = vector.load %arg3[%c0_3, %c0_4] : memref<8x128xf32, #tpu.memory_space<vmem>>, vector<8x128xf32>
    %8 = arith.addf %6, %7 : vector<8x128xf32>
    %c0_5 = arith.constant 0 : index
    %c0_6 = arith.constant 0 : index
    %c0_7 = arith.constant 0 : index
    %c0_8 = arith.constant 0 : index
    %9 = vector.load %arg7[%c0_5, %c0_6, %c0_7, %c0_8] : memref<4x1x8x128xf32, #tpu.memory_space<vmem>>, vector<1x1x8x128xf32>
    %10 = vector.shape_cast %9 : vector<1x1x8x128xf32> to vector<8x128xf32>
    %11 = vector.shape_cast %8 : vector<8x128xf32> to vector<1x1x8x128xf32>
    tpu.vector_store %arg7[%c0_5, %c0_6, %c0_7, %c0_8], %11 {strides = array<i32>} : memref<4x1x8x128xf32, #tpu.memory_space<vmem>>, vector<1x1x8x128xf32>,
    %c1 = arith.constant 1 : index
    %c0_9 = arith.constant 0 : index
    %c0_10 = arith.constant 0 : index
    %c0_11 = arith.constant 0 : index
    %12 = vector.load %arg2[%c1, %c0_9, %c0_10, %c0_11] : memref<4x1x8x128xf32, #tpu.memory_space<vmem>>, vector<1x1x8x128xf32>
    %13 = vector.shape_cast %12 : vector<1x1x8x128xf32> to vector<8x128xf32>
    %14 = arith.negf %13 : vector<8x128xf32>
    %15 = math.exp %14 : vector<8x128xf32>
    %cst_12 = arith.constant 1.000000e+00 : f32
    %16 = vector.broadcast %cst_12 : f32 to vector<8x128xf32>
    %17 = arith.addf %16, %15 : vector<8x128xf32>
    %18 = arith.divf %16, %17 : vector<8x128xf32>
    %c0_13 = arith.constant 0 : index
    %c0_14 = arith.constant 0 : index
    %19 = vector.load %arg4[%c0_13, %c0_14] : memref<8x128xf32, #tpu.memory_space<vmem>>, vector<8x128xf32>
    %20 = arith.addf %18, %19 : vector<8x128xf32>
    %c1_15 = arith.constant 1 : index
    %c0_16 = arith.constant 0 : index
    %c0_17 = arith.constant 0 : index
    %c0_18 = arith.constant 0 : index
    %21 = vector.load %arg7[%c1_15, %c0_16, %c0_17, %c0_18] : memref<4x1x8x128xf32, #tpu.memory_space<vmem>>, vector<1x1x8x128xf32>
    %22 = vector.shape_cast %21 : vector<1x1x8x128xf32> to vector<8x128xf32>
    %23 = vector.shape_cast %20 : vector<8x128xf32> to vector<1x1x8x128xf32>
    tpu.vector_store %arg7[%c1_15, %c0_16, %c0_17, %c0_18], %23 {strides = array<i32>} : memref<4x1x8x128xf32, #tpu.memory_space<vmem>>, vector<1x1x8x128xf32>,
    %c2 = arith.constant 2 : index
    %c0_19 = arith.constant 0 : index
    %c0_20 = arith.constant 0 : index
    %c0_21 = arith.constant 0 : index
    %24 = vector.load %arg2[%c2, %c0_19, %c0_20, %c0_21] : memref<4x1x8x128xf32, #tpu.memory_space<vmem>>, vector<1x1x8x128xf32>
    %25 = vector.shape_cast %24 : vector<1x1x8x128xf32> to vector<8x128xf32>
    %26 = math.exp %25 : vector<8x128xf32>
    %c0_22 = arith.constant 0 : index
    %c0_23 = arith.constant 0 : index
    %27 = vector.load %arg5[%c0_22, %c0_23] : memref<8x128xf32, #tpu.memory_space<vmem>>, vector<8x128xf32>
    %28 = arith.mulf %26, %27 : vector<8x128xf32>
    %c2_24 = arith.constant 2 : index
    %c0_25 = arith.constant 0 : index
    %c0_26 = arith.constant 0 : index
    %c0_27 = arith.constant 0 : index
    %29 = vector.load %arg7[%c2_24, %c0_25, %c0_26, %c0_27] : memref<4x1x8x128xf32, #tpu.memory_space<vmem>>, vector<1x1x8x128xf32>
    %30 = vector.shape_cast %29 : vector<1x1x8x128xf32> to vector<8x128xf32>
    %31 = vector.shape_cast %28 : vector<8x128xf32> to vector<1x1x8x128xf32>
    tpu.vector_store %arg7[%c2_24, %c0_25, %c0_26, %c0_27], %31 {strides = array<i32>} : memref<4x1x8x128xf32, #tpu.memory_space<vmem>>, vector<1x1x8x128xf32>,
    %c3 = arith.constant 3 : index
    %c0_28 = arith.constant 0 : index
    %c0_29 = arith.constant 0 : index
    %c0_30 = arith.constant 0 : index
    %32 = vector.load %arg2[%c3, %c0_28, %c0_29, %c0_30] : memref<4x1x8x128xf32, #tpu.memory_space<vmem>>, vector<1x1x8x128xf32>
    %33 = vector.shape_cast %32 : vector<1x1x8x128xf32> to vector<8x128xf32>
    %34 = math.exp %33 : vector<8x128xf32>
    %c0_31 = arith.constant 0 : index
    %c0_32 = arith.constant 0 : index
    %35 = vector.load %arg6[%c0_31, %c0_32] : memref<8x128xf32, #tpu.memory_space<vmem>>, vector<8x128xf32>
    %36 = arith.mulf %34, %35 : vector<8x128xf32>
    %c3_33 = arith.constant 3 : index
    %c0_34 = arith.constant 0 : index
    %c0_35 = arith.constant 0 : index
    %c0_36 = arith.constant 0 : index
    %37 = vector.load %arg7[%c3_33, %c0_34, %c0_35, %c0_36] : memref<4x1x8x128xf32, #tpu.memory_space<vmem>>, vector<1x1x8x128xf32>
    %38 = vector.shape_cast %37 : vector<1x1x8x128xf32> to vector<8x128xf32>
    %39 = vector.shape_cast %36 : vector<8x128xf32> to vector<1x1x8x128xf32>
    tpu.vector_store %arg7[%c3_33, %c0_34, %c0_35, %c0_36], %39 {strides = array<i32>} : memref<4x1x8x128xf32, #tpu.memory_space<vmem>>, vector<1x1x8x128xf32>,
    return
  }
  func.func @transform_0(%arg0: i32, %arg1: i32) -> (i32, i32, i32, i32) {
    %c0_i32 = arith.constant 0 : i32
    %c0_i32_0 = arith.constant 0 : i32
    %c0_i32_1 = arith.constant 0 : i32
    return %c0_i32, %arg0, %arg1, %c0_i32_0 : i32, i32, i32, i32
  }
  func.func @transform_1(%arg0: i32, %arg1: i32) -> (i32, i32) {
    %c0_i32 = arith.constant 0 : i32
    %c0_i32_0 = arith.constant 0 : i32
    return %arg1, %c0_i32 : i32, i32
  }
  func.func @transform_2(%arg0: i32, %arg1: i32) -> (i32, i32) {
    %c0_i32 = arith.constant 0 : i32
    %c0_i32_0 = arith.constant 0 : i32
    return %arg1, %c0_i32 : i32, i32
  }
  func.func @transform_3(%arg0: i32, %arg1: i32) -> (i32, i32) {
    %c0_i32 = arith.constant 0 : i32
    %c0_i32_0 = arith.constant 0 : i32
    return %arg1, %c0_i32 : i32, i32
  }
  func.func @transform_4(%arg0: i32, %arg1: i32) -> (i32, i32) {
    %c0_i32 = arith.constant 0 : i32
    %c0_i32_0 = arith.constant 0 : i32
    return %arg1, %c0_i32 : i32, i32
  }
  func.func @transform_5(%arg0: i32, %arg1: i32) -> (i32, i32, i32, i32) {
    %c0_i32 = arith.constant 0 : i32
    %c0_i32_0 = arith.constant 0 : i32
    %c0_i32_1 = arith.constant 0 : i32
    return %c0_i32, %arg0, %arg1, %c0_i32_0 : i32, i32, i32, i32
  }
}

</mosaic_0001>

<llo_original>
// kernel: tpu_custom_call.1
$region0: #{tpu_custom_call.1}
  #allocation0 [shape = 'u32[]', space=smem, size = 0x4, offset = 0x4, fixed_abs, tag = 'smem constant byte address 0x4 - core index']
  #allocation1 [shape = 'u32[144,128]{1,0:T(1,128)}', space=vmem, size = 0x12000, scoped, tag = 'internal scratch']
  %s0 = inlined_call_operand.hbm [shape: f32[25,2,16,128], index: 0, kind: input, shape index: {}]
  %s1 = inlined_call_operand.hbm [shape: f32[16,128], index: 1, kind: input, shape index: {}]
  %s2 = inlined_call_operand.hbm [shape: f32[16,128], index: 2, kind: input, shape index: {}]
  %s3 = inlined_call_operand.hbm [shape: f32[16,128], index: 3, kind: input, shape index: {}]
  %s4 = inlined_call_operand.hbm [shape: f32[16,128], index: 4, kind: input, shape index: {}]
  %s5 = inlined_call_operand.hbm [shape: f32[4,2,16,128], index: 5, kind: output, shape index: {}]
  %s6 = sld [smem:[#allocation0]]
  $region73: #{tpu_custom_call.1} parent=0
    _
  %s8 = ssub.s32 1, %s6
  %s9 = scalar_select 0, %s8, %s6
  $region1: #{tpu_custom_call.1} parent=0
    #allocation2 [shape = 'u8[32768]{0}', space=vmem, size = 0x8000, scoped, tag = 'input window, operand 0']
    #allocation3 [shape = 's32[2]{0}', space=sflag, size = 0x8, scoped, tag = 'scoped memory for tpu_custom_call.1']
    #allocation4 [shape = 's32[2]{0}', space=sflag, size = 0x8, scoped, tag = 'scoped memory for tpu_custom_call.1']
    #allocation5 [shape = 'u8[8192]{0}', space=vmem, size = 0x2000, scoped, tag = 'input window, operand 1']
    #allocation6 [shape = 's32[2]{0}', space=sflag, size = 0x8, scoped, tag = 'scoped memory for tpu_custom_call.1']
    #allocation7 [shape = 'u8[8192]{0}', space=vmem, size = 0x2000, scoped, tag = 'input window, operand 2']
    #allocation8 [shape = 'u8[8192]{0}', space=vmem, size = 0x2000, scoped, tag = 'input window, operand 3']
    #allocation9 [shape = 's32[2]{0}', space=sflag, size = 0x8, scoped, tag = 'scoped memory for tpu_custom_call.1']
    #allocation10 [shape = 'u8[8192]{0}', space=vmem, size = 0x2000, scoped, tag = 'input window, operand 4']
    #allocation11 [shape = 'u8[32768]{0}', space=vmem, size = 0x8000, scoped, tag = 'output window, operand 0']
    %10 = vsyncpa [#allocation3], 0
    %s11 = scalar_lea.sflag [#allocation3], 1
    %12 = vsyncpa %s11, 0
    %13 = vsyncpa [#allocation6], 0
    %s14 = scalar_lea.sflag [#allocation6], 1
    %15 = vsyncpa %s14, 0
    %16 = vsyncpa [#allocation9], 0
    %s17 = scalar_lea.sflag [#allocation9], 1
    %18 = vsyncpa %s17, 0
    %19 = vsyncpa [#allocation4], 0
    %s20 = scalar_lea.sflag [#allocation4], 1
    %21 = vsyncpa %s20, 0
    loop: start=0, step=1, limit=6
    $region2: #{tpu_custom_call.1} parent=1 // loop_pre_header
      _
    $region3: #{tpu_custom_call.1} parent=1 // loop_header
      %s23 = sphi 0, %s27
      %p24 = scmp.ge.s32.totalorder %s23, 6
      %s30 = sphi 0, %s42
      %s31 = sphi 0, %s38
      %s32 = sphi 0, %s30
      %s33 = sphi 0, %s31
      %s34 = sphi 0, %s32
      %s35 = sphi 0, %s33
      %s47 = sphi 0, %s49
      %s50 = sphi 0, %s47
      %s51 = sphi 0, %s50
      %s67 = sphi 0, %s51
      %s73 = sphi 0, %s75
      %s76 = sphi 0, %s73
      %s77 = sphi 0, %s76
      %s93 = sphi 0, %s77
      %s99 = sphi 0, %s101
      %s102 = sphi 0, %s99
      %s103 = sphi 0, %s102
      %s119 = sphi 0, %s103
      %s125 = sphi 0, %s127
      %s128 = sphi 0, %s125
      %s129 = sphi 0, %s128
      %s145 = sphi 0, %s129
      %s151 = sphi 0, %s153
      %s154 = sphi 0, %s151
      %s155 = sphi 0, %s154
      %s171 = sphi 0, %s155
      %s179 = sphi 0, %s181
      %s182 = sphi 0, %s179
      %s183 = sphi 0, %s182
      %s199 = sphi 0, %s183
    $region4: #{tpu_custom_call.1} parent=1 // loop_header_branch
      %26 = sbr.rel (%p24) target = $region8
    $region5: #{tpu_custom_call.1} parent=1 // loop_body
      %s28 = ssub.s32 %s23, 1
      %s29 = ssub.s32 %s23, 2
      %s36 = sadd.s32 1, %s31
      %p37 = scmp.ge.s32.totalorder %s36, 2
      %s38 = scalar_select %p37, 0, %s36
      %s39 = sadd.s32 1, %s30
      %s40 = scalar_select %p37, %s39, %s30
      %p41 = scmp.ge.s32.totalorder %s40, 2
      %s42 = scalar_select %p41, 0, %s40
      %s43 = ssub.s32 %s30, %s42
      %s44 = ssub.s32 %s31, %s38
      %s45 = sor.u32 %s43, %s44
      %p46 = scmp.eq.s32.totalorder %s45, 0
      %s48 = sadd.s32 %s47, 1
      %s49 = scalar_select %p46, %s47, %s48
      %p52 = pneg %p46
      %p53 = scmp.eq.s32.totalorder %s23, 3
      %p54 = por %p52, %p53
      %p55 = scmp.ne.s32.totalorder %s47, %s50
      %p56 = scmp.eq.s32.totalorder %s23, 0
      %p57 = por %p55, %p56
      %p58 = scmp.ne.s32.totalorder %s47, %s50
      %p59 = scmp.eq.s32.totalorder %s28, 3
      %p60 = por %p58, %p59
      %p61 = scmp.ne.s32.totalorder %s50, %s51
      %p62 = scmp.eq.s32.totalorder %s28, 0
      %p63 = por %p61, %p62
      %p64 = scmp.ne.s32.totalorder %s50, %s51
      %p65 = scmp.eq.s32.totalorder %s29, 3
      %p66 = por %p64, %p65
      %p68 = scmp.ne.s32.totalorder %s51, %s67
      %p69 = scmp.eq.s32.totalorder %s29, 0
      %p70 = por %p68, %p69
      %s71 = ssub.s32 %s31, %s38
      %p72 = scmp.eq.s32.totalorder %s71, 0
      %s74 = sadd.s32 %s73, 1
      %s75 = scalar_select %p72, %s73, %s74
      %p78 = pneg %p72
      %p79 = scmp.eq.s32.totalorder %s23, 3
      %p80 = por %p78, %p79
      %p81 = scmp.ne.s32.totalorder %s73, %s76
      %p82 = scmp.eq.s32.totalorder %s23, 0
      %p83 = por %p81, %p82
      %p84 = scmp.ne.s32.totalorder %s73, %s76
      %p85 = scmp.eq.s32.totalorder %s28, 3
      %p86 = por %p84, %p85
      %p87 = scmp.ne.s32.totalorder %s76, %s77
      %p88 = scmp.eq.s32.totalorder %s28, 0
      %p89 = por %p87, %p88
      %p90 = scmp.ne.s32.totalorder %s76, %s77
      %p91 = scmp.eq.s32.totalorder %s29, 3
      %p92 = por %p90, %p91
      %p94 = scmp.ne.s32.totalorder %s77, %s93
      %p95 = scmp.eq.s32.totalorder %s29, 0
      %p96 = por %p94, %p95
      %s97 = ssub.s32 %s31, %s38
      %p98 = scmp.eq.s32.totalorder %s97, 0
      %s100 = sadd.s32 %s99, 1
      %s101 = scalar_select %p98, %s99, %s100
      %p104 = pneg %p98
      %p105 = scmp.eq.s32.totalorder %s23, 3
      %p106 = por %p104, %p105
      %p107 = scmp.ne.s32.totalorder %s99, %s102
      %p108 = scmp.eq.s32.totalorder %s23, 0
      %p109 = por %p107, %p108
      %p110 = scmp.ne.s32.totalorder %s99, %s102
      %p111 = scmp.eq.s32.totalorder %s28, 3
      %p112 = por %p110, %p111
      %p113 = scmp.ne.s32.totalorder %s102, %s103
      %p114 = scmp.eq.s32.totalorder %s28, 0
      %p115 = por %p113, %p114
      %p116 = scmp.ne.s32.totalorder %s102, %s103
      %p117 = scmp.eq.s32.totalorder %s29, 3
      %p118 = por %p116, %p117
      %p120 = scmp.ne.s32.totalorder %s103, %s119
      %p121 = scmp.eq.s32.totalorder %s29, 0
      %p122 = por %p120, %p121
      %s123 = ssub.s32 %s31, %s38
      %p124 = scmp.eq.s32.totalorder %s123, 0
      %s126 = sadd.s32 %s125, 1
      %s127 = scalar_select %p124, %s125, %s126
      %p130 = pneg %p124
      %p131 = scmp.eq.s32.totalorder %s23, 3
      %p132 = por %p130, %p131
      %p133 = scmp.ne.s32.totalorder %s125, %s128
      %p134 = scmp.eq.s32.totalorder %s23, 0
      %p135 = por %p133, %p134
      %p136 = scmp.ne.s32.totalorder %s125, %s128
      %p137 = scmp.eq.s32.totalorder %s28, 3
      %p138 = por %p136, %p137
      %p139 = scmp.ne.s32.totalorder %s128, %s129
      %p140 = scmp.eq.s32.totalorder %s28, 0
      %p141 = por %p139, %p140
      %p142 = scmp.ne.s32.totalorder %s128, %s129
      %p143 = scmp.eq.s32.totalorder %s29, 3
      %p144 = por %p142, %p143
      %p146 = scmp.ne.s32.totalorder %s129, %s145
      %p147 = scmp.eq.s32.totalorder %s29, 0
      %p148 = por %p146, %p147
      %s149 = ssub.s32 %s31, %s38
      %p150 = scmp.eq.s32.totalorder %s149, 0
      %s152 = sadd.s32 %s151, 1
      %s153 = scalar_select %p150, %s151, %s152
      %p156 = pneg %p150
      %p157 = scmp.eq.s32.totalorder %s23, 3
      %p158 = por %p156, %p157
      %p159 = scmp.ne.s32.totalorder %s151, %s154
      %p160 = scmp.eq.s32.totalorder %s23, 0
      %p161 = por %p159, %p160
      %p162 = scmp.ne.s32.totalorder %s151, %s154
      %p163 = scmp.eq.s32.totalorder %s28, 3
      %p164 = por %p162, %p163
      %p165 = scmp.ne.s32.totalorder %s154, %s155
      %p166 = scmp.eq.s32.totalorder %s28, 0
      %p167 = por %p165, %p166
      %p168 = scmp.ne.s32.totalorder %s154, %s155
      %p169 = scmp.eq.s32.totalorder %s29, 3
      %p170 = por %p168, %p169
      %p172 = scmp.ne.s32.totalorder %s155, %s171
      %p173 = scmp.eq.s32.totalorder %s29, 0
      %p174 = por %p172, %p173
      %s175 = ssub.s32 %s30, %s42
      %s176 = ssub.s32 %s31, %s38
      %s177 = sor.u32 %s175, %s176
      %p178 = scmp.eq.s32.totalorder %s177, 0
      %s180 = sadd.s32 %s179, 1
      %s181 = scalar_select %p178, %s179, %s180
      %p184 = pneg %p178
      %p185 = scmp.eq.s32.totalorder %s23, 3
      %p186 = por %p184, %p185
      %p187 = scmp.ne.s32.totalorder %s179, %s182
      %p188 = scmp.eq.s32.totalorder %s23, 0
      %p189 = por %p187, %p188
      %p190 = scmp.ne.s32.totalorder %s179, %s182
      %p191 = scmp.eq.s32.totalorder %s28, 3
      %p192 = por %p190, %p191
      %p193 = scmp.ne.s32.totalorder %s182, %s183
      %p194 = scmp.eq.s32.totalorder %s28, 0
      %p195 = por %p193, %p194
      %p196 = scmp.ne.s32.totalorder %s182, %s183
      %p197 = scmp.eq.s32.totalorder %s29, 3
      %p198 = por %p196, %p197
      %p200 = scmp.ne.s32.totalorder %s183, %s199
      %p201 = scmp.eq.s32.totalorder %s29, 0
      %p202 = por %p200, %p201
      %p203 = scmp.le.s32.totalorder 1, %s23
      %p204 = scmp.lt.s32.totalorder %s23, 5
      %p205 = pnand %p203, %p204
      %p206 = pneg %p205
      // Predicated region
      $region9: #{tpu_custom_call.1} parent=5 // pred_check
        _
      $region10: #{tpu_custom_call.1} parent=5 // pred_check_branch
        %208 = sbr.rel (%p205) target = $region12
      $region11: #{tpu_custom_call.1} parent=5 // pred_region
        %s209 = ssub.s32 %s23, 1
      $region12: #{tpu_custom_call.1} parent=5 // pred_fallthru
        _
      %p210 = scmp.lt.s32.totalorder %s23, 4
      // Predicated region
      $region13: #{tpu_custom_call.1} parent=5 // pred_check
        %p211 = pneg %p210
      $region14: #{tpu_custom_call.1} parent=5 // pred_check_branch
        %213 = sbr.rel (%p211) target = $region16
      $region15: #{tpu_custom_call.1} parent=5 // pred_region
        // Predicated region
        $region17: #{tpu_custom_call.1} parent=15 // pred_check
          %p214 = pneg %p57
        $region18: #{tpu_custom_call.1} parent=15 // pred_check_branch
          %216 = sbr.rel (%p214) target = $region20
        $region19: #{tpu_custom_call.1} parent=15 // pred_region
          %s217 = sand.u32 %s47, 1
          %s218 = scalar_lea.sflag [#allocation3], %s217
          %s219 = sand.u32 %s47, 1
          %s220 = smul.addr %s219, 32
          %s221 = scalar_lea.vmem [#allocation2], %s220
          %s223 = ssub.s32 512, 512
          %224 = vsyncadd %s218, %s223
          %s225 = smul.addr %s30, 2
          %s226 = sadd.s32 %s31, %s225
          %s227 = smul.addr %s226, 128
          %s228 = scalar_lea.hbm %s0, %s227
          %s229 = sshll.u32 %s221, 4
          %s230 = int_to_ptr.vmem [resolvable:$true] %s229
          %235 = dma.hbm_to_vmem [thread:$0]  %s228, 512, %s230, %s218, 512, 128, 8
        $region20: #{tpu_custom_call.1} parent=15 // pred_fallthru
          _
        // Predicated region
        $region21: #{tpu_custom_call.1} parent=15 // pred_check
          %p236 = pneg %p83
        $region22: #{tpu_custom_call.1} parent=15 // pred_check_branch
          %238 = sbr.rel (%p236) target = $region24
        $region23: #{tpu_custom_call.1} parent=15 // pred_region
          %s239 = sand.u32 %s23, 1
          %s240 = scalar_lea.sflag [#allocation6], %s239
          %s241 = sand.u32 %s73, 1
          %s242 = smul.addr %s241, 8
          %s243 = scalar_lea.vmem [#allocation5], %s242
          %s245 = ssub.s32 128, 128
          %246 = vsyncadd %s240, %s245
          %s247 = smul.addr %s31, 128
          %s248 = scalar_lea.hbm %s1, %s247
          %s250 = sshll.u32 %s243, 4
          %s251 = int_to_ptr.vmem [resolvable:$true] %s250
          %253 = dma.hbm_to_vmem [thread:$0]  %s248, 128, %s251, %s240
        $region24: #{tpu_custom_call.1} parent=15 // pred_fallthru
          _
        // Predicated region
        $region25: #{tpu_custom_call.1} parent=15 // pred_check
          %p254 = pneg %p109
        $region26: #{tpu_custom_call.1} parent=15 // pred_check_branch
          %256 = sbr.rel (%p254) target = $region28
        $region27: #{tpu_custom_call.1} parent=15 // pred_region
          %s257 = sand.u32 %s23, 1
          %s258 = scalar_lea.sflag [#allocation6], %s257
          %s259 = sand.u32 %s99, 1
          %s260 = smul.addr %s259, 8
          %s261 = scalar_lea.vmem [#allocation7], %s260
          %s263 = ssub.s32 128, 128
          %264 = vsyncadd %s258, %s263
          %s265 = smul.addr %s31, 128
          %s266 = scalar_lea.hbm %s2, %s265
          %s268 = sshll.u32 %s261, 4
          %s269 = int_to_ptr.vmem [resolvable:$true] %s268
          %271 = dma.hbm_to_vmem [thread:$0]  %s266, 128, %s269, %s258
        $region28: #{tpu_custom_call.1} parent=15 // pred_fallthru
          _
        // Predicated region
        $region29: #{tpu_custom_call.1} parent=15 // pred_check
          %p272 = pneg %p135
        $region30: #{tpu_custom_call.1} parent=15 // pred_check_branch
          %274 = sbr.rel (%p272) target = $region32
        $region31: #{tpu_custom_call.1} parent=15 // pred_region
          %s275 = sand.u32 %s23, 1
          %s276 = scalar_lea.sflag [#allocation9], %s275
          %s277 = sand.u32 %s125, 1
          %s278 = smul.addr %s277, 8
          %s279 = scalar_lea.vmem [#allocation8], %s278
          %s281 = ssub.s32 128, 128
          %282 = vsyncadd %s276, %s281
          %s283 = smul.addr %s31, 128
          %s284 = scalar_lea.hbm %s3, %s283
          %s286 = sshll.u32 %s279, 4
          %s287 = int_to_ptr.vmem [resolvable:$true] %s286
          %289 = dma.hbm_to_vmem [thread:$0]  %s284, 128, %s287, %s276
        $region32: #{tpu_custom_call.1} parent=15 // pred_fallthru
          _
        // Predicated region
        $region33: #{tpu_custom_call.1} parent=15 // pred_check
          %p290 = pneg %p161
        $region34: #{tpu_custom_call.1} parent=15 // pred_check_branch
          %292 = sbr.rel (%p290) target = $region36
        $region35: #{tpu_custom_call.1} parent=15 // pred_region
          %s293 = sand.u32 %s23, 1
          %s294 = scalar_lea.sflag [#allocation9], %s293
          %s295 = sand.u32 %s151, 1
          %s296 = smul.addr %s295, 8
          %s297 = scalar_lea.vmem [#allocation10], %s296
          %s299 = ssub.s32 128, 128
          %300 = vsyncadd %s294, %s299
          %s301 = smul.addr %s31, 128
          %s302 = scalar_lea.hbm %s4, %s301
          %s304 = sshll.u32 %s297, 4
          %s305 = int_to_ptr.vmem [resolvable:$true] %s304
          %307 = dma.hbm_to_vmem [thread:$0]  %s302, 128, %s305, %s294
        $region36: #{tpu_custom_call.1} parent=15 // pred_fallthru
          _
      $region16: #{tpu_custom_call.1} parent=5 // pred_fallthru
        _
      %p308 = scmp.le.s32.totalorder 1, %s23
      %p309 = scmp.lt.s32.totalorder %s23, 5
      %p310 = pnand %p308, %p309
      %p311 = pneg %p310
      // Predicated region
      $region37: #{tpu_custom_call.1} parent=5 // pred_check
        _
      $region38: #{tpu_custom_call.1} parent=5 // pred_check_branch
        %313 = sbr.rel (%p310) target = $region40
      $region39: #{tpu_custom_call.1} parent=5 // pred_region
        %s314 = ssub.s32 %s23, 1
        %s315 = sand.u32 %s50, 1
        %s316 = scalar_lea.sflag [#allocation3], %s315
        %s317 = sand.u32 %s50, 1
        %s318 = smul.addr %s317, 32
        %s319 = scalar_lea.vmem [#allocation2], %s318
        // Predicated region
        $region41: #{tpu_custom_call.1} parent=39 // pred_check
          %p320 = pneg %p63
        $region42: #{tpu_custom_call.1} parent=39 // pred_check_branch
          %322 = sbr.rel (%p320) target = $region44
        $region43: #{tpu_custom_call.1} parent=39 // pred_region
          %323 = dma.done %s316, 512
        $region44: #{tpu_custom_call.1} parent=39 // pred_fallthru
          _
        %s324 = sand.u32 %s28, 1
        %s325 = scalar_lea.sflag [#allocation6], %s324
        %s326 = sand.u32 %s76, 1
        %s327 = smul.addr %s326, 8
        %s328 = scalar_lea.vmem [#allocation5], %s327
        // Predicated region
        $region45: #{tpu_custom_call.1} parent=39 // pred_check
          %p329 = pneg %p89
        $region46: #{tpu_custom_call.1} parent=39 // pred_check_branch
          %331 = sbr.rel (%p329) target = $region48
        $region47: #{tpu_custom_call.1} parent=39 // pred_region
          %332 = dma.done %s325, 128
        $region48: #{tpu_custom_call.1} parent=39 // pred_fallthru
          _
        %s333 = sand.u32 %s28, 1
        %s334 = scalar_lea.sflag [#allocation6], %s333
        %s335 = sand.u32 %s102, 1
        %s336 = smul.addr %s335, 8
        %s337 = scalar_lea.vmem [#allocation7], %s336
        // Predicated region
        $region49: #{tpu_custom_call.1} parent=39 // pred_check
          %p338 = pneg %p115
        $region50: #{tpu_custom_call.1} parent=39 // pred_check_branch
          %340 = sbr.rel (%p338) target = $region52
        $region51: #{tpu_custom_call.1} parent=39 // pred_region
          %341 = dma.done %s334, 128
        $region52: #{tpu_custom_call.1} parent=39 // pred_fallthru
          _
        %s342 = sand.u32 %s28, 1
        %s343 = scalar_lea.sflag [#allocation9], %s342
        %s344 = sand.u32 %s128, 1
        %s345 = smul.addr %s344, 8
        %s346 = scalar_lea.vmem [#allocation8], %s345
        // Predicated region
        $region53: #{tpu_custom_call.1} parent=39 // pred_check
          %p347 = pneg %p141
        $region54: #{tpu_custom_call.1} parent=39 // pred_check_branch
          %349 = sbr.rel (%p347) target = $region56
        $region55: #{tpu_custom_call.1} parent=39 // pred_region
          %350 = dma.done %s343, 128
        $region56: #{tpu_custom_call.1} parent=39 // pred_fallthru
          _
        %s351 = sand.u32 %s28, 1
        %s352 = scalar_lea.sflag [#allocation9], %s351
        %s353 = sand.u32 %s154, 1
        %s354 = smul.addr %s353, 8
        %s355 = scalar_lea.vmem [#allocation10], %s354
        // Predicated region
        $region57: #{tpu_custom_call.1} parent=39 // pred_check
          %p356 = pneg %p167
        $region58: #{tpu_custom_call.1} parent=39 // pred_check_branch
          %358 = sbr.rel (%p356) target = $region60
        $region59: #{tpu_custom_call.1} parent=39 // pred_region
          %359 = dma.done %s352, 128
        $region60: #{tpu_custom_call.1} parent=39 // pred_fallthru
          _
        %s360 = sand.u32 %s50, 1
        %s361 = scalar_lea.sflag [#allocation3], %s360
        %s362 = sand.u32 %s50, 1
        %s363 = smul.addr %s362, 32
        %s364 = scalar_lea.vmem [#allocation2], %s363
        %p365 = pneg %p63
        %p366 = pneg %p60
        %s367 = sand.u32 %s28, 1
        %s368 = scalar_lea.sflag [#allocation6], %s367
        %s369 = sand.u32 %s76, 1
        %s370 = smul.addr %s369, 8
        %s371 = scalar_lea.vmem [#allocation5], %s370
        %p372 = pneg %p89
        %p373 = pneg %p86
        %s374 = sand.u32 %s28, 1
        %s375 = scalar_lea.sflag [#allocation6], %s374
        %s376 = sand.u32 %s102, 1
        %s377 = smul.addr %s376, 8
        %s378 = scalar_lea.vmem [#allocation7], %s377
        %p379 = pneg %p115
        %p380 = pneg %p112
        %s381 = sand.u32 %s28, 1
        %s382 = scalar_lea.sflag [#allocation9], %s381
        %s383 = sand.u32 %s128, 1
        %s384 = smul.addr %s383, 8
        %s385 = scalar_lea.vmem [#allocation8], %s384
        %p386 = pneg %p141
        %p387 = pneg %p138
        %s388 = sand.u32 %s28, 1
        %s389 = scalar_lea.sflag [#allocation9], %s388
        %s390 = sand.u32 %s154, 1
        %s391 = smul.addr %s390, 8
        %s392 = scalar_lea.vmem [#allocation10], %s391
        %p393 = pneg %p167
        %p394 = pneg %p164
        %p395 = pneg %p195
        %p396 = pneg %p192
        %s397 = sand.u32 %s182, 1
        %s398 = scalar_lea.sflag [#allocation4], %s397
        %s399 = sand.u32 %s182, 1
        %s400 = smul.addr %s399, 32
        %s401 = scalar_lea.vmem [#allocation11], %s400
        %v402 = vld [vmem:[%s319] sm:$0xff]
        %v403 = vxor.u32 %v402, 2147483648
        %v404 = vmul.f32 %v403, 1.442695
        %v405 = vpow.pop %v404
        %v406 = vadd.f32 %v405, 1.0
        %v407 = vrcp.pop %v406
        %v408 = vmul.f32 1.0, %v407
        %v409 = vld [vmem:[%s328] sm:$0xff]
        %v410 = vadd.f32 %v408, %v409
        %411 = vst [vmem:[%s401] sm:$0xff] %v410
        %s412 = scalar_lea.vmem %s319, 8 [#allocation2]
        %v413 = vld [vmem:[%s412] sm:$0xff]
        %v414 = vxor.u32 %v413, 2147483648
        %v415 = vmul.f32 %v414, 1.442695
        %v416 = vpow.pop %v415
        %v417 = vadd.f32 %v416, 1.0
        %v418 = vrcp.pop %v417
        %v419 = vmul.f32 1.0, %v418
        %v420 = vld [vmem:[%s337] sm:$0xff]
        %v421 = vadd.f32 %v419, %v420
        %s422 = scalar_lea.vmem %s401, 8 [#allocation11]
        %423 = vst [vmem:[%s422] sm:$0xff] %v421
        %s424 = scalar_lea.vmem %s319, 16 [#allocation2]
        %v425 = vld [vmem:[%s424] sm:$0xff]
        %v426 = vmul.f32 %v425, 1.442695
        %v427 = vpow.pop %v426
        %v428 = vld [vmem:[%s346] sm:$0xff]
        %v429 = vmul.f32 %v427, %v428
        %s430 = scalar_lea.vmem %s401, 16 [#allocation11]
        %431 = vst [vmem:[%s430] sm:$0xff] %v429
        %s432 = scalar_lea.vmem %s319, 24 [#allocation2]
        %v433 = vld [vmem:[%s432] sm:$0xff]
        %v434 = vmul.f32 %v433, 1.442695
        %v435 = vpow.pop %v434
        %v436 = vld [vmem:[%s355] sm:$0xff]
        %v437 = vmul.f32 %v435, %v436
        %s438 = scalar_lea.vmem %s401, 24 [#allocation11]
        %439 = vst [vmem:[%s438] sm:$0xff] %v437
        %s440 = sand.u32 %s182, 1
        %s441 = scalar_lea.sflag [#allocation4], %s440
        %s442 = sand.u32 %s182, 1
        %s443 = smul.addr %s442, 32
        %s444 = scalar_lea.vmem [#allocation11], %s443
        // Predicated region
        $region61: #{tpu_custom_call.1} parent=39 // pred_check
          %p445 = pneg %p192
        $region62: #{tpu_custom_call.1} parent=39 // pred_check_branch
          %447 = sbr.rel (%p445) target = $region64
        $region63: #{tpu_custom_call.1} parent=39 // pred_region
          %s449 = ssub.s32 512, 512
          %450 = vsyncadd %s441, %s449
          %s451 = smul.addr %s32, 2
          %s452 = sadd.s32 %s33, %s451
          %s453 = smul.addr %s452, 128
          %s454 = scalar_lea.hbm %s5, %s453
          %s455 = sshll.u32 %s444, 4
          %s456 = int_to_ptr.vmem [resolvable:$true] %s455
          %461 = dma.vmem_to_hbm [thread:$0]  %s456, 512, %s454, %s441, 128, 512, 8
        $region64: #{tpu_custom_call.1} parent=39 // pred_fallthru
          _
      $region40: #{tpu_custom_call.1} parent=5 // pred_fallthru
        _
      %p462 = scmp.le.s32.totalorder 2, %s23
      // Predicated region
      $region65: #{tpu_custom_call.1} parent=5 // pred_check
        %p463 = pneg %p462
      $region66: #{tpu_custom_call.1} parent=5 // pred_check_branch
        %465 = sbr.rel (%p463) target = $region68
      $region67: #{tpu_custom_call.1} parent=5 // pred_region
        %s466 = ssub.s32 %s23, 2
        // Predicated region
        $region69: #{tpu_custom_call.1} parent=67 // pred_check
          %p467 = pneg %p198
        $region70: #{tpu_custom_call.1} parent=67 // pred_check_branch
          %469 = sbr.rel (%p467) target = $region72
        $region71: #{tpu_custom_call.1} parent=67 // pred_region
          %s470 = sand.u32 %s183, 1
          %s471 = scalar_lea.sflag [#allocation4], %s470
          %s472 = sand.u32 %s183, 1
          %s473 = smul.addr %s472, 32
          %s474 = scalar_lea.vmem [#allocation11], %s473
          %475 = dma.done %s471, 512
        $region72: #{tpu_custom_call.1} parent=67 // pred_fallthru
          _
      $region68: #{tpu_custom_call.1} parent=5 // pred_fallthru
        _
    $region6: #{tpu_custom_call.1} parent=1 // loop_footer
      %s27 = sadd.s32 1, %s23
    $region7: #{tpu_custom_call.1} parent=1 // loop_footer_branch
      %22 = sbr.rel target = $region3
    $region8: #{tpu_custom_call.1} parent=1 // loop_exit
      _
    %476 = vsyncpa [#allocation3], 1
    %s477 = scalar_lea.sflag [#allocation3], 1
    %478 = vsyncpa %s477, 1
    %479 = vsyncpa [#allocation6], 1
    %s480 = scalar_lea.sflag [#allocation6], 1
    %481 = vsyncpa %s480, 1
    %482 = vsyncpa [#allocation9], 1
    %s483 = scalar_lea.sflag [#allocation9], 1
    %484 = vsyncpa %s483, 1
    %485 = vsyncpa [#allocation4], 1
    %s486 = scalar_lea.sflag [#allocation4], 1
    %487 = vsyncpa %s486, 1

</llo_original>
